<compile_context>
chip_gen: v6e
topology: v6e:2x2x1
jax: 0.10.0
libtpu: 0.0.40
codegen_flags: <defaults>
</compile_context>

<pallas_src>
from functools import partial

import jax
import jax.numpy as jnp
from jax.experimental import pallas as pl
from jax.experimental.pallas import tpu as pltpu


def _loss_kernel(x_ref, t_ref, l1_ref, grad_ref, *, scales, H, W, L):
    """Per-block partial sums of the masked-L1 and multiscale-gradient losses.

    x_ref, t_ref     : VMEM refs, shape (TB, L), native dtype, L = pad128(H*W).
    l1_ref, grad_ref : VMEM refs, shape (1, 8, 128), float32 (scalar splat).
    """
    # TODO(synk): on v6e/v7x a bf16 compute path (accumulate in f32 only) would
    # halve VALU work for bf16 inputs; kept in f32 so the same kernel is exact
    # on v5e (no bf16 VPU) and matches the PyTorch f32 semantics.
    x = x_ref[...].astype(jnp.float32)
    t = t_ref[...].astype(jnp.float32)
    TB = x.shape[0]

    valid = jnp.logical_not(jnp.isnan(t))      # single isnan pass over target
    d = x - t                                  # shared by L1 and gradient terms
    dz = jnp.where(valid, d, 0.0)              # NaN-free where target is invalid
    vmask = valid.astype(jnp.float32)          # rollable numeric validity mask

    # Masked L1 (sum reduction).  |dz| is 0 where target is NaN; a NaN in the
    # *input* at a valid target position still poisons the sum (matches PyTorch).
    l1 = jnp.sum(jnp.abs(dz))

    # Hoisted index arrays: one broadcasted_iota per block (JAX does not CSE
    # broadcasts, so these must not live inside the scale loop).
    flat = jax.lax.broadcasted_iota(jnp.int32, (TB, L), 1)   # flattened pixel index
    col = flat % W                                           # column within image row

    # Multiscale gradient-matching MSE (sum reduction).  Pairs whose partner
    # would wrap around a row / the image are excluded by the boundary masks;
    # the lane-padding region (index >= H*W) carries NaN targets -> vmask == 0.
    g = jnp.float32(0.0)
    for scale in range(scales):
        s = 2 ** scale
        if s < W:   # x direction: partner is s columns to the right (flat offset s)
            rdz = pltpu.roll(dz, shift=L - s, axis=1)        # rdz[i] = dz[(i + s) % L]
            rvm = pltpu.roll(vmask, shift=L - s, axis=1)
            pair = valid & (rvm > 0.5) & (col < (W - s))     # both ends valid, no wrap
            diff = rdz - dz
            g = g + jnp.sum(jnp.where(pair, diff * diff, 0.0))
        if s < H:   # y direction: partner is s rows down (flat offset s * W)
            off = s * W
            rdz = pltpu.roll(dz, shift=L - off, axis=1)      # rdz[i] = dz[(i + s*W) % L]
            rvm = pltpu.roll(vmask, shift=L - off, axis=1)
            pair = valid & (rvm > 0.5) & (flat < (H - s) * W)
            diff = rdz - dz
            g = g + jnp.sum(jnp.where(pair, diff * diff, 0.0))
    # TODO(synk): offload these full-block reductions to the idle MXU (dot with a
    # ones vector, preferred_element_type=f32) for another ~10-20% on v6e/v7x.

    l1_ref[...] = jnp.full((1, 8, 128), l1, dtype=jnp.float32)
    grad_ref[...] = jnp.full((1, 8, 128), g, dtype=jnp.float32)


def dynamic_l1_multiscale_grad_loss_scaled(inp, target, scales):
    """inp/target: (N, C, H, W), any float dtype.  Returns (l1_sum, ms_grad_sum)."""
    N, C, H, W = inp.shape
    B = N * C
    HW = H * W
    L = pl.cdiv(HW, 128) * 128          # lane-pad the flattened slab

    # Keep the native dtype on the HBM side (no up-cast in the wrapper): for bf16
    # models this halves HBM traffic; the kernel casts to f32 internally.
    x2 = inp.reshape(B, HW)
    t2 = target.reshape(B, HW)
    if L != HW:
        # Lane padding: zero input + NaN target -> fully masked, contributes 0.
        x2 = jnp.pad(x2, ((0, 0), (0, L - HW)))
        t2 = jnp.pad(t2, ((0, 0), (0, L - HW)), constant_values=jnp.nan)

    # --- VMEM-aware tile sizing (padded bytes, incl. temporaries) --------------
    try:  # generation-specific budget: 128 MiB physical on v5e/v6e, 64 MiB on v7x
        vmem_cap = int(pltpu.get_tpu_info().vmem_capacity_bytes)
    except Exception:
        vmem_cap = 64 << 20                               # conservative (v7x-sized)
    vmem_limit = min((vmem_cap * 3) // 4, 64 << 20)       # 48 MiB v7x / 64 MiB v5e,v6e
    ws_budget = vmem_limit - (16 << 20)                   # headroom for Mosaic scratch

    itemsize = x2.dtype.itemsize
    # Working set per row of L lanes: 2 inputs x 2 pipeline buffers (native dtype)
    # + ~10 full-size f32/i32 temporaries (dz, vmask, iotas, rolled copies, diff,
    # reduction trees).  L is already lane-padded and tb is kept a multiple of 8,
    # so these are true padded-VMEM bytes.
    ws_per_row = 2 * 2 * L * itemsize + 10 * L * 4
    tb = (ws_budget // max(ws_per_row, 1)) // 8 * 8
    tb = int(max(8, min(tb, 4096)))
    n_blocks = pl.cdiv(B, tb)
    tb = pl.cdiv(pl.cdiv(B, n_blocks), 8) * 8             # rebalance to minimise padding
    # TODO(synk): for very large H*W slabs (ws_per_row > ws_budget/8) this kernel
    # needs flat-axis tiling with a 2**(scales-1)*W-element halo; not implemented.

    pad_b = (-B) % tb
    if pad_b:
        # Padding rows: zero input + NaN target -> fully masked, contribute 0.
        x2 = jnp.concatenate([x2, jnp.zeros((pad_b, L), x2.dtype)], axis=0)
        t2 = jnp.concatenate([t2, jnp.full((pad_b, L), jnp.nan, t2.dtype)], axis=0)
    g_blocks = (B + pad_b) // tb

    kernel = partial(_loss_kernel, scales=scales, H=H, W=W, L=L)
    l1_part, grad_part = pl.pallas_call(
        kernel,
        grid=(g_blocks,),
        out_shape=(
            jax.ShapeDtypeStruct((g_blocks, 8, 128), jnp.float32),
            jax.ShapeDtypeStruct((g_blocks, 8, 128), jnp.float32),
        ),
        in_specs=[
            pl.BlockSpec((tb, L), lambda b: (b, 0)),
            pl.BlockSpec((tb, L), lambda b: (b, 0)),
        ],
        out_specs=(
            pl.BlockSpec((1, 8, 128), lambda b: (b, 0, 0)),
            pl.BlockSpec((1, 8, 128), lambda b: (b, 0, 0)),
        ),
        compiler_params=pltpu.CompilerParams(
            # TODO(synk): on v7x, switch this axis to pltpu.CORE_PARALLEL so both
            # TensorCores work on disjoint B-blocks; "parallel" is safe everywhere.
            dimension_semantics=("parallel",),
            vmem_limit_bytes=int(vmem_limit),
        ),
    )(x2, t2)
    # Tiny host-side reduction of the per-block partials.
    return l1_part[:, 0, 0].sum(), grad_part[:, 0, 0].sum()


def _reference(x, t, scales):
    """Pure-JAX mirror of the PyTorch module (full shifted-copy construction)."""
    nn_mask = ~jnp.isnan(t)
    l1 = jnp.sum(jnp.where(nn_mask, jnp.abs(x - t), 0.0))
    g = jnp.float32(0.0)
    H, W = x.shape[2], x.shape[3]
    for scale in range(scales):
        s = 2 ** scale
        if s < W:
            sx = jnp.concatenate([x[:, :, :, s:], x[:, :, :, W - s:]], axis=3)
            st = jnp.concatenate([t[:, :, :, s:], t[:, :, :, W - s:]], axis=3)
            gi, gt = sx - x, st - t
            g = g + jnp.sum(jnp.where(~jnp.isnan(gt), (gi - gt) ** 2, 0.0))
        if s < H:
            sx = jnp.concatenate([x[:, :, s:, :], x[:, :, H - s:, :]], axis=2)
            st = jnp.concatenate([t[:, :, s:, :], t[:, :, H - s:, :]], axis=2)
            gi, gt = sx - x, st - t
            g = g + jnp.sum(jnp.where(~jnp.isnan(gt), (gi - gt) ** 2, 0.0))
    return l1, g


if __name__ == "__main__":
    # Deterministic "module config": number of scales.
    SCALES = 3

    key = jax.random.PRNGKey(0)
    k1, k2, k3 = jax.random.split(key, 3)

    N, C, H, W = 2, 4, 16, 16
    inp = jax.random.normal(k1, (N, C, H, W), dtype=jnp.float32)
    tgt = jax.random.normal(k2, (N, C, H, W), dtype=jnp.float32)
    # Inject NaNs into the target to exercise the not-NaN masking path.
    nan_mask = jax.random.uniform(k3, (N, C, H, W)) < 0.15
    tgt = jnp.where(nan_mask, jnp.float32(jnp.nan), tgt)

    l1, ms_grad = dynamic_l1_multiscale_grad_loss_scaled(inp, tgt, SCALES)
    l1 = jax.block_until_ready(l1)
    ms_grad = jax.block_until_ready(ms_grad)

    l1_ref, grad_ref = _reference(inp, tgt, SCALES)
    assert jnp.allclose(l1, l1_ref, rtol=1e-4, atol=1e-3), (l1, l1_ref)
    assert jnp.allclose(ms_grad, grad_ref, rtol=1e-4, atol=1e-3), (ms_grad, grad_ref)

    print("KERNEL_OK")
</pallas_src>

<mosaic_0001>
module attributes {stable_mosaic.version = 11 : i64} {
  func.func @_loss_kernel(%arg0: i32, %arg1: memref<8x256xf32, #tpu.memory_space<vmem>>, %arg2: memref<8x256xf32, #tpu.memory_space<vmem>>, %arg3: memref<1x8x128xf32, #tpu.memory_space<vmem>>, %arg4: memref<1x8x128xf32, #tpu.memory_space<vmem>>) attributes {dimension_semantics = [#tpu.dimension_semantics<parallel>], iteration_bounds = array<i64: 1>, scalar_prefetch = 0 : i64, scratch_operands = 0 : i64, tpu.core_type = #tpu.core_type<tc>, window_params = [{transform_indices = @transform_0, window_bounds = array<i64: 8, 256>}, {transform_indices = @transform_1, window_bounds = array<i64: 8, 256>}, {transform_indices = @transform_2, window_bounds = array<i64: 1, 8, 128>}, {transform_indices = @transform_3, window_bounds = array<i64: 1, 8, 128>}]} {
    %c0 = arith.constant 0 : index
    %c0_0 = arith.constant 0 : index
    %0 = vector.load %arg1[%c0, %c0_0] : memref<8x256xf32, #tpu.memory_space<vmem>>, vector<8x256xf32>
    %c0_1 = arith.constant 0 : index
    %c0_2 = arith.constant 0 : index
    %1 = vector.load %arg2[%c0_1, %c0_2] : memref<8x256xf32, #tpu.memory_space<vmem>>, vector<8x256xf32>
    %2 = arith.cmpf one, %1, %1 : vector<8x256xf32>
    %cst = arith.constant dense<true> : vector<8x256xi1>
    %3 = arith.xori %2, %cst : vector<8x256xi1>
    %4 = arith.subf %0, %1 : vector<8x256xf32>
    %cst_3 = arith.constant 0.000000e+00 : f32
    %5 = vector.broadcast %cst_3 : f32 to vector<8x256xf32>
    %6 = arith.select %3, %4, %5 : vector<8x256xi1>, vector<8x256xf32>
    %7 = arith.extui %3 : vector<8x256xi1> to vector<8x256xi32>
    %8 = arith.sitofp %7 : vector<8x256xi32> to vector<8x256xf32>
    %9 = math.absf %6 : vector<8x256xf32>
    %10 = vector.shape_cast %9 : vector<8x256xf32> to vector<1x8x256xf32>
    %cst_4 = arith.constant dense<0.000000e+00> : vector<1xf32>
    %11 = vector.multi_reduction <add>, %10, %cst_4 [1, 2] : vector<1x8x256xf32> to vector<1xf32>
    %12 = vector.shape_cast %11 : vector<1xf32> to vector<1x1x1xf32>
    %13 = vector.extract %12[0, 0, 0] : f32 from vector<1x1x1xf32>
    %14 = tpu.iota {dimensions = array<i32: 1>} : vector<8x256xi32>
    %c16_i32 = arith.constant 16 : i32
    %c0_i32 = arith.constant 0 : i32
    %15 = arith.cmpi eq, %c16_i32, %c0_i32 : i32
    %c1_i32 = arith.constant 1 : i32
    %16 = arith.select %15, %c1_i32, %c16_i32 : i32
    %17 = vector.broadcast %16 : i32 to vector<8x256xi32>
    %18 = arith.remsi %14, %17 : vector<8x256xi32>
    %c0_i32_5 = arith.constant 0 : i32
    %19 = vector.broadcast %c0_i32_5 : i32 to vector<8x256xi32>
    %20 = arith.cmpi ne, %18, %19 : vector<8x256xi32>
    %c0_i32_6 = arith.constant 0 : i32
    %21 = vector.broadcast %c0_i32_6 : i32 to vector<8x256xi32>
    %22 = arith.cmpi slt, %18, %21 : vector<8x256xi32>
    %c0_i32_7 = arith.constant 0 : i32
    %23 = arith.cmpi slt, %16, %c0_i32_7 : i32
    %24 = vector.broadcast %23 : i1 to vector<8x256xi1>
    %25 = vector.broadcast %24 : vector<8x256xi1> to vector<8x256xi1>
    %26 = arith.xori %22, %25 : vector<8x256xi1>
    %27 = arith.andi %26, %20 : vector<8x256xi1>
    %28 = vector.broadcast %16 : i32 to vector<8x256xi32>
    %29 = arith.addi %18, %28 : vector<8x256xi32>
    %30 = arith.select %27, %29, %18 : vector<8x256xi1>, vector<8x256xi32>
    %c255_i32 = arith.constant 255 : i32
    %31 = tpu.dynamic_rotate %6 by %c255_i32 dim 1 : vector<8x256xf32>, i32 -> vector<8x256xf32>
    %c255_i32_8 = arith.constant 255 : i32
    %32 = tpu.dynamic_rotate %8 by %c255_i32_8 dim 1 : vector<8x256xf32>, i32 -> vector<8x256xf32>
    %cst_9 = arith.constant 5.000000e-01 : f32
    %33 = vector.broadcast %cst_9 : f32 to vector<8x256xf32>
    %34 = arith.cmpf ogt, %32, %33 : vector<8x256xf32>
    %35 = arith.andi %3, %34 : vector<8x256xi1>
    %c15_i32 = arith.constant 15 : i32
    %36 = vector.broadcast %c15_i32 : i32 to vector<8x256xi32>
    %37 = arith.cmpi slt, %30, %36 : vector<8x256xi32>
    %38 = arith.andi %35, %37 : vector<8x256xi1>
    %39 = arith.subf %31, %6 : vector<8x256xf32>
    %40 = arith.mulf %39, %39 : vector<8x256xf32>
    %cst_10 = arith.constant 0.000000e+00 : f32
    %41 = vector.broadcast %cst_10 : f32 to vector<8x256xf32>
    %42 = arith.select %38, %40, %41 : vector<8x256xi1>, vector<8x256xf32>
    %43 = vector.shape_cast %42 : vector<8x256xf32> to vector<1x8x256xf32>
    %cst_11 = arith.constant dense<0.000000e+00> : vector<1xf32>
    %44 = vector.multi_reduction <add>, %43, %cst_11 [1, 2] : vector<1x8x256xf32> to vector<1xf32>
    %45 = vector.shape_cast %44 : vector<1xf32> to vector<1x1x1xf32>
    %46 = vector.extract %45[0, 0, 0] : f32 from vector<1x1x1xf32>
    %cst_12 = arith.constant 0.000000e+00 : f32
    %47 = arith.addf %cst_12, %46 : f32
    %c240_i32 = arith.constant 240 : i32
    %48 = tpu.dynamic_rotate %6 by %c240_i32 dim 1 : vector<8x256xf32>, i32 -> vector<8x256xf32>
    %c240_i32_13 = arith.constant 240 : i32
    %49 = tpu.dynamic_rotate %8 by %c240_i32_13 dim 1 : vector<8x256xf32>, i32 -> vector<8x256xf32>
    %cst_14 = arith.constant 5.000000e-01 : f32
    %50 = vector.broadcast %cst_14 : f32 to vector<8x256xf32>
    %51 = arith.cmpf ogt, %49, %50 : vector<8x256xf32>
    %52 = arith.andi %3, %51 : vector<8x256xi1>
    %c240_i32_15 = arith.constant 240 : i32
    %53 = vector.broadcast %c240_i32_15 : i32 to vector<8x256xi32>
    %54 = arith.cmpi slt, %14, %53 : vector<8x256xi32>
    %55 = arith.andi %52, %54 : vector<8x256xi1>
    %56 = arith.subf %48, %6 : vector<8x256xf32>
    %57 = arith.mulf %56, %56 : vector<8x256xf32>
    %cst_16 = arith.constant 0.000000e+00 : f32
    %58 = vector.broadcast %cst_16 : f32 to vector<8x256xf32>
    %59 = arith.select %55, %57, %58 : vector<8x256xi1>, vector<8x256xf32>
    %60 = vector.shape_cast %59 : vector<8x256xf32> to vector<1x8x256xf32>
    %cst_17 = arith.constant dense<0.000000e+00> : vector<1xf32>
    %61 = vector.multi_reduction <add>, %60, %cst_17 [1, 2] : vector<1x8x256xf32> to vector<1xf32>
    %62 = vector.shape_cast %61 : vector<1xf32> to vector<1x1x1xf32>
    %63 = vector.extract %62[0, 0, 0] : f32 from vector<1x1x1xf32>
    %64 = arith.addf %47, %63 : f32
    %c254_i32 = arith.constant 254 : i32
    %65 = tpu.dynamic_rotate %6 by %c254_i32 dim 1 : vector<8x256xf32>, i32 -> vector<8x256xf32>
    %c254_i32_18 = arith.constant 254 : i32
    %66 = tpu.dynamic_rotate %8 by %c254_i32_18 dim 1 : vector<8x256xf32>, i32 -> vector<8x256xf32>
    %cst_19 = arith.constant 5.000000e-01 : f32
    %67 = vector.broadcast %cst_19 : f32 to vector<8x256xf32>
    %68 = arith.cmpf ogt, %66, %67 : vector<8x256xf32>
    %69 = arith.andi %3, %68 : vector<8x256xi1>
    %c14_i32 = arith.constant 14 : i32
    %70 = vector.broadcast %c14_i32 : i32 to vector<8x256xi32>
    %71 = arith.cmpi slt, %30, %70 : vector<8x256xi32>
    %72 = arith.andi %69, %71 : vector<8x256xi1>
    %73 = arith.subf %65, %6 : vector<8x256xf32>
    %74 = arith.mulf %73, %73 : vector<8x256xf32>
    %cst_20 = arith.constant 0.000000e+00 : f32
    %75 = vector.broadcast %cst_20 : f32 to vector<8x256xf32>
    %76 = arith.select %72, %74, %75 : vector<8x256xi1>, vector<8x256xf32>
    %77 = vector.shape_cast %76 : vector<8x256xf32> to vector<1x8x256xf32>
    %cst_21 = arith.constant dense<0.000000e+00> : vector<1xf32>
    %78 = vector.multi_reduction <add>, %77, %cst_21 [1, 2] : vector<1x8x256xf32> to vector<1xf32>
    %79 = vector.shape_cast %78 : vector<1xf32> to vector<1x1x1xf32>
    %80 = vector.extract %79[0, 0, 0] : f32 from vector<1x1x1xf32>
    %81 = arith.addf %64, %80 : f32
    %c224_i32 = arith.constant 224 : i32
    %82 = tpu.dynamic_rotate %6 by %c224_i32 dim 1 : vector<8x256xf32>, i32 -> vector<8x256xf32>
    %c224_i32_22 = arith.constant 224 : i32
    %83 = tpu.dynamic_rotate %8 by %c224_i32_22 dim 1 : vector<8x256xf32>, i32 -> vector<8x256xf32>
    %cst_23 = arith.constant 5.000000e-01 : f32
    %84 = vector.broadcast %cst_23 : f32 to vector<8x256xf32>
    %85 = arith.cmpf ogt, %83, %84 : vector<8x256xf32>
    %86 = arith.andi %3, %85 : vector<8x256xi1>
    %c224_i32_24 = arith.constant 224 : i32
    %87 = vector.broadcast %c224_i32_24 : i32 to vector<8x256xi32>
    %88 = arith.cmpi slt, %14, %87 : vector<8x256xi32>
    %89 = arith.andi %86, %88 : vector<8x256xi1>
    %90 = arith.subf %82, %6 : vector<8x256xf32>
    %91 = arith.mulf %90, %90 : vector<8x256xf32>
    %cst_25 = arith.constant 0.000000e+00 : f32
    %92 = vector.broadcast %cst_25 : f32 to vector<8x256xf32>
    %93 = arith.select %89, %91, %92 : vector<8x256xi1>, vector<8x256xf32>
    %94 = vector.shape_cast %93 : vector<8x256xf32> to vector<1x8x256xf32>
    %cst_26 = arith.constant dense<0.000000e+00> : vector<1xf32>
    %95 = vector.multi_reduction <add>, %94, %cst_26 [1, 2] : vector<1x8x256xf32> to vector<1xf32>
    %96 = vector.shape_cast %95 : vector<1xf32> to vector<1x1x1xf32>
    %97 = vector.extract %96[0, 0, 0] : f32 from vector<1x1x1xf32>
    %98 = arith.addf %81, %97 : f32
    %c252_i32 = arith.constant 252 : i32
    %99 = tpu.dynamic_rotate %6 by %c252_i32 dim 1 : vector<8x256xf32>, i32 -> vector<8x256xf32>
    %c252_i32_27 = arith.constant 252 : i32
    %100 = tpu.dynamic_rotate %8 by %c252_i32_27 dim 1 : vector<8x256xf32>, i32 -> vector<8x256xf32>
    %cst_28 = arith.constant 5.000000e-01 : f32
    %101 = vector.broadcast %cst_28 : f32 to vector<8x256xf32>
    %102 = arith.cmpf ogt, %100, %101 : vector<8x256xf32>
    %103 = arith.andi %3, %102 : vector<8x256xi1>
    %c12_i32 = arith.constant 12 : i32
    %104 = vector.broadcast %c12_i32 : i32 to vector<8x256xi32>
    %105 = arith.cmpi slt, %30, %104 : vector<8x256xi32>
    %106 = arith.andi %103, %105 : vector<8x256xi1>
    %107 = arith.subf %99, %6 : vector<8x256xf32>
    %108 = arith.mulf %107, %107 : vector<8x256xf32>
    %cst_29 = arith.constant 0.000000e+00 : f32
    %109 = vector.broadcast %cst_29 : f32 to vector<8x256xf32>
    %110 = arith.select %106, %108, %109 : vector<8x256xi1>, vector<8x256xf32>
    %111 = vector.shape_cast %110 : vector<8x256xf32> to vector<1x8x256xf32>
    %cst_30 = arith.constant dense<0.000000e+00> : vector<1xf32>
    %112 = vector.multi_reduction <add>, %111, %cst_30 [1, 2] : vector<1x8x256xf32> to vector<1xf32>
    %113 = vector.shape_cast %112 : vector<1xf32> to vector<1x1x1xf32>
    %114 = vector.extract %113[0, 0, 0] : f32 from vector<1x1x1xf32>
    %115 = arith.addf %98, %114 : f32
    %c192_i32 = arith.constant 192 : i32
    %116 = tpu.dynamic_rotate %6 by %c192_i32 dim 1 : vector<8x256xf32>, i32 -> vector<8x256xf32>
    %c192_i32_31 = arith.constant 192 : i32
    %117 = tpu.dynamic_rotate %8 by %c192_i32_31 dim 1 : vector<8x256xf32>, i32 -> vector<8x256xf32>
    %cst_32 = arith.constant 5.000000e-01 : f32
    %118 = vector.broadcast %cst_32 : f32 to vector<8x256xf32>
    %119 = arith.cmpf ogt, %117, %118 : vector<8x256xf32>
    %120 = arith.andi %3, %119 : vector<8x256xi1>
    %c192_i32_33 = arith.constant 192 : i32
    %121 = vector.broadcast %c192_i32_33 : i32 to vector<8x256xi32>
    %122 = arith.cmpi slt, %14, %121 : vector<8x256xi32>
    %123 = arith.andi %120, %122 : vector<8x256xi1>
    %124 = arith.subf %116, %6 : vector<8x256xf32>
    %125 = arith.mulf %124, %124 : vector<8x256xf32>
    %cst_34 = arith.constant 0.000000e+00 : f32
    %126 = vector.broadcast %cst_34 : f32 to vector<8x256xf32>
    %127 = arith.select %123, %125, %126 : vector<8x256xi1>, vector<8x256xf32>
    %128 = vector.shape_cast %127 : vector<8x256xf32> to vector<1x8x256xf32>
    %cst_35 = arith.constant dense<0.000000e+00> : vector<1xf32>
    %129 = vector.multi_reduction <add>, %128, %cst_35 [1, 2] : vector<1x8x256xf32> to vector<1xf32>
    %130 = vector.shape_cast %129 : vector<1xf32> to vector<1x1x1xf32>
    %131 = vector.extract %130[0, 0, 0] : f32 from vector<1x1x1xf32>
    %132 = arith.addf %115, %131 : f32
    %133 = vector.broadcast %13 : f32 to vector<1x8x128xf32>
    %c0_36 = arith.constant 0 : index
    %c0_37 = arith.constant 0 : index
    %c0_38 = arith.constant 0 : index
    %134 = vector.load %arg3[%c0_36, %c0_37, %c0_38] : memref<1x8x128xf32, #tpu.memory_space<vmem>>, vector<1x8x128xf32>
    tpu.vector_store %arg3[%c0_36, %c0_37, %c0_38], %133 {strides = array<i32>} : memref<1x8x128xf32, #tpu.memory_space<vmem>>, vector<1x8x128xf32>,
    %135 = vector.broadcast %132 : f32 to vector<1x8x128xf32>
    %c0_39 = arith.constant 0 : index
    %c0_40 = arith.constant 0 : index
    %c0_41 = arith.constant 0 : index
    %136 = vector.load %arg4[%c0_39, %c0_40, %c0_41] : memref<1x8x128xf32, #tpu.memory_space<vmem>>, vector<1x8x128xf32>
    tpu.vector_store %arg4[%c0_39, %c0_40, %c0_41], %135 {strides = array<i32>} : memref<1x8x128xf32, #tpu.memory_space<vmem>>, vector<1x8x128xf32>,
    return
  }
  func.func @transform_0(%arg0: i32) -> (i32, i32) {
    %c0_i32 = arith.constant 0 : i32
    %c0_i32_0 = arith.constant 0 : i32
    return %arg0, %c0_i32 : i32, i32
  }
  func.func @transform_1(%arg0: i32) -> (i32, i32) {
    %c0_i32 = arith.constant 0 : i32
    %c0_i32_0 = arith.constant 0 : i32
    return %arg0, %c0_i32 : i32, i32
  }
  func.func @transform_2(%arg0: i32) -> (i32, i32, i32) {
    %c0_i32 = arith.constant 0 : i32
    %c0_i32_0 = arith.constant 0 : i32
    %c0_i32_1 = arith.constant 0 : i32
    return %arg0, %c0_i32, %c0_i32_0 : i32, i32, i32
  }
  func.func @transform_3(%arg0: i32) -> (i32, i32, i32) {
    %c0_i32 = arith.constant 0 : i32
    %c0_i32_0 = arith.constant 0 : i32
    %c0_i32_1 = arith.constant 0 : i32
    return %arg0, %c0_i32, %c0_i32_0 : i32, i32, i32
  }
}

</mosaic_0001>

<llo_original>
// kernel: tpu_custom_call.1
$region0: #{tpu_custom_call.1}
  #allocation0 [shape = 'u32[]', space=smem, size = 0x4, offset = 0x4, fixed_abs, tag = 'smem constant byte address 0x4 - core index']
  #allocation1 [shape = 'u32[144,128]{1,0:T(1,128)}', space=vmem, size = 0x12000, scoped, tag = 'internal scratch']
  %s0 = inlined_call_operand.hbm [shape: f32[8,256], index: 0, kind: input, shape index: {}]
  %s1 = inlined_call_operand.hbm [shape: f32[8,256], index: 1, kind: input, shape index: {}]
  %s2 = inlined_call_operand.hbm [shape: f32[1,8,128], index: 2, kind: output, shape index: {0}]
  %s3 = inlined_call_operand.hbm [shape: f32[1,8,128], index: 3, kind: output, shape index: {1}]
  %4 = xla_tuple %s2, %s3
  %s5 = sld [smem:[#allocation0]]
  $region34: #{tpu_custom_call.1} parent=0
    _
  %s7 = ssub.s32 1, %s5
  %s8 = scalar_select 0, %s7, %s5
  $region1: #{tpu_custom_call.1} parent=0
    #allocation2 [shape = 'u8[8192]{0}', space=vmem, size = 0x2000, scoped, tag = 'input window, operand 0, single buffered']
    #allocation3 [shape = 's32[1]{0}', space=sflag, size = 0x4, scoped, tag = 'scoped memory for tpu_custom_call.1']
    #allocation4 [shape = 's32[1]{0}', space=sflag, size = 0x4, scoped, tag = 'scoped memory for tpu_custom_call.1']
    #allocation5 [shape = 'u8[8192]{0}', space=vmem, size = 0x2000, scoped, tag = 'input window, operand 1, single buffered']
    #allocation6 [shape = 's32[1]{0}', space=sflag, size = 0x4, scoped, tag = 'scoped memory for tpu_custom_call.1']
    #allocation7 [shape = 'u8[4096]{0}', space=vmem, size = 0x1000, scoped, tag = 'output window, operand 0, single buffered']
    #allocation8 [shape = 'u8[4096]{0}', space=vmem, size = 0x1000, scoped, tag = 'output window, operand 1, single buffered']
    #allocation9 [shape = 's32[1]{0}', space=sflag, size = 0x4, scoped, tag = 'scoped memory for tpu_custom_call.1']
    %9 = vsyncpa [#allocation3], 0
    %10 = vsyncpa [#allocation6], 0
    %11 = vsyncpa [#allocation4], 0
    %12 = vsyncpa [#allocation9], 0
    // Predicated region
    $region2: #{tpu_custom_call.1} parent=1 // pred_check
      _
    $region3: #{tpu_custom_call.1} parent=1 // pred_check_branch
      %14 = sbr.rel (0) target = $region5
    $region4: #{tpu_custom_call.1} parent=1 // pred_region
      %s16 = ssub.s32 256, 256
      %17 = vsyncadd [#allocation3], %s16
      %s19 = sshll.u32 [#allocation2], 4
      %s20 = int_to_ptr.vmem [resolvable:$true] %s19
      %22 = dma.hbm_to_vmem [thread:$0]  %s0, 256, %s20, [#allocation3]
    $region5: #{tpu_custom_call.1} parent=1 // pred_fallthru
      _
    // Predicated region
    $region6: #{tpu_custom_call.1} parent=1 // pred_check
      _
    $region7: #{tpu_custom_call.1} parent=1 // pred_check_branch
      %24 = sbr.rel (0) target = $region9
    $region8: #{tpu_custom_call.1} parent=1 // pred_region
      %s26 = ssub.s32 256, 256
      %27 = vsyncadd [#allocation6], %s26
      %s29 = sshll.u32 [#allocation5], 4
      %s30 = int_to_ptr.vmem [resolvable:$true] %s29
      %32 = dma.hbm_to_vmem [thread:$0]  %s1, 256, %s30, [#allocation6]
    $region9: #{tpu_custom_call.1} parent=1 // pred_fallthru
      _
    // Predicated region
    $region10: #{tpu_custom_call.1} parent=1 // pred_check
      _
    $region11: #{tpu_custom_call.1} parent=1 // pred_check_branch
      %34 = sbr.rel (0) target = $region13
    $region12: #{tpu_custom_call.1} parent=1 // pred_region
      %35 = dma.done [#allocation3], 256
    $region13: #{tpu_custom_call.1} parent=1 // pred_fallthru
      _
    // Predicated region
    $region14: #{tpu_custom_call.1} parent=1 // pred_check
      _
    $region15: #{tpu_custom_call.1} parent=1 // pred_check_branch
      %37 = sbr.rel (0) target = $region17
    $region16: #{tpu_custom_call.1} parent=1 // pred_region
      %38 = dma.done [#allocation6], 256
    $region17: #{tpu_custom_call.1} parent=1 // pred_fallthru
      _
    %v39 = vld [vmem:[#allocation2] sm:$0xff]
    %v40 = vld [vmem:[#allocation2 + $0x8] sm:$0xff]
    %v41 = vld [vmem:[#allocation5] sm:$0xff]
    %v42 = vld [vmem:[#allocation5 + $0x8] sm:$0xff]
    %vm43 = vcmp.ne.f32.partialorder %v41, %v41
    %vm44 = vcmp.ne.f32.partialorder %v42, %v42
    %vm45 = vmxor %vm43, 1
    %vm46 = vmxor %vm44, 1
    %v47 = vsub.f32 %v39, %v41
    %v48 = vsub.f32 %v40, %v42
    %v49 = vsel %vm45, %v47, 0.0
    %v50 = vsel %vm46, %v48, 0.0
    %v51 = vsel %vm45, 1, 0
    %v52 = vsel %vm46, 1, 0
    %v53 = vcvt.s32.f32 %v51
    %v54 = vcvt.s32.f32 %v52
    %v55 = vand.u32 2147483647, %v49
    %v56 = vand.u32 2147483647, %v50
    %v57 = vadd.f32 %v55, %v56
    %58 = vadd.xlane.f32.xlu0 %v57
    %v59 = vpop.xlane.xlu0 %58
    %v60 = vrot.slane %v59, 4
    %v61 = vadd.f32 %v59, %v60
    %v62 = vrot.slane %v61, 2
    %v63 = vadd.f32 %v61, %v62
    %v64 = vrot.slane %v63, 1
    %v65 = vadd.f32 %v63, %v64
    %s66 = vtos %v65
    %v67 = vlaneseq
    %v68 = vand.u32 %v67, 127
    %v69 = vadd.s32 %v68, 128
    %vm70 = vcmp.lt.s32.totalorder %v68, 0
    %v71 = vsub.s32 0, %v68
    %v72 = vsel %vm70, %v71, %v68
    %v73 = vshrl.u32 %v72, 4
    %v74 = vand.u32 %v72, 15
    %v75 = vsub.s32 0, %v74
    %v76 = vsel %vm70, %v75, %v74
    %vm77 = vcmp.lt.s32.totalorder %v69, 0
    %v78 = vsub.s32 0, %v69
    %v79 = vsel %vm77, %v78, %v69
    %v80 = vshrl.u32 %v79, 4
    %v81 = vand.u32 %v79, 15
    %v82 = vsub.s32 0, %v81
    %v83 = vsel %vm77, %v82, %v81
    %vm84 = vcmp.ne.s32.totalorder %v76, 0
    %vm85 = vcmp.ne.s32.totalorder %v83, 0
    %vm86 = vcmp.lt.s32.totalorder %v76, 0
    %vm87 = vcmp.lt.s32.totalorder %v83, 0
    %vm88 = vmand %vm86, %vm84
    %vm89 = vmand %vm87, %vm85
    %v90 = vadd.s32 %v76, 16
    %v91 = vadd.s32 %v83, 16
    %v92 = vsel %vm88, %v90, %v76
    %v93 = vsel %vm89, %v91, %v83
    %94 = vrot.lane.b32.xlu0 %v49, 127
    %v95 = vpop.permute.xlu0 %94
    %96 = vrot.lane.b32.xlu0 %v50, 127
    %v97 = vpop.permute.xlu0 %96
    %vm98 = vcmp.lt.s32.totalorder %v68, 127
    %v99 = vsel %vm98, %v95, %v97
    %v100 = vsel %vm98, %v97, %v95
    %101 = vrot.lane.b32.xlu0 %v53, 127
    %v102 = vpop.permute.xlu0 %101
    %103 = vrot.lane.b32.xlu0 %v54, 127
    %v104 = vpop.permute.xlu0 %103
    %v105 = vsel %vm98, %v102, %v104
    %v106 = vsel %vm98, %v104, %v102
    %vm107 = vcmp.gt.f32.partialorder %v105, 0.5
    %vm108 = vcmp.gt.f32.partialorder %v106, 0.5
    %vm109 = vmand %vm45, %vm107
    %vm110 = vmand %vm46, %vm108
    %vm111 = vcmp.lt.s32.totalorder %v92, 15
    %vm112 = vcmp.lt.s32.totalorder %v93, 15
    %vm113 = vmand %vm109, %vm111
    %vm114 = vmand %vm110, %vm112
    %v115 = vsub.f32 %v99, %v49
    %v116 = vsub.f32 %v100, %v50
    %v117 = vmul.f32 %v115, %v115
    %v118 = vmul.f32 %v116, %v116
    %v119 = vsel %vm113, %v117, 0.0
    %v120 = vsel %vm114, %v118, 0.0
    %v121 = vadd.f32 %v119, %v120
    %122 = vadd.xlane.f32.xlu0 %v121
    %v123 = vpop.xlane.xlu0 %122
    %v124 = vrot.slane %v123, 4
    %v125 = vadd.f32 %v123, %v124
    %v126 = vrot.slane %v125, 2
    %v127 = vadd.f32 %v125, %v126
    %v128 = vrot.slane %v127, 1
    %v129 = vadd.f32 %v127, %v128
    %s130 = vtos %v129
    %s131 = sadd.f32 %s130, 0.0
    %132 = vrot.lane.b32.xlu0 %v49, 112
    %v133 = vpop.permute.xlu0 %132
    %134 = vrot.lane.b32.xlu0 %v50, 112
    %v135 = vpop.permute.xlu0 %134
    %vm136 = vcmp.lt.s32.totalorder %v68, 112
    %v137 = vsel %vm136, %v133, %v135
    %v138 = vsel %vm136, %v135, %v133
    %139 = vrot.lane.b32.xlu0 %v53, 112
    %v140 = vpop.permute.xlu0 %139
    %141 = vrot.lane.b32.xlu0 %v54, 112
    %v142 = vpop.permute.xlu0 %141
    %v143 = vsel %vm136, %v140, %v142
    %v144 = vsel %vm136, %v142, %v140
    %vm145 = vcmp.gt.f32.partialorder %v143, 0.5
    %vm146 = vcmp.gt.f32.partialorder %v144, 0.5
    %vm147 = vmand %vm45, %vm145
    %vm148 = vmand %vm46, %vm146
    %vm149 = vcmp.lt.s32.totalorder %v68, 240
    %vm150 = vcmp.lt.s32.totalorder %v69, 240
    %vm151 = vmand %vm147, %vm149
    %vm152 = vmand %vm148, %vm150
    %v153 = vsub.f32 %v137, %v49
    %v154 = vsub.f32 %v138, %v50
    %v155 = vmul.f32 %v153, %v153
    %v156 = vmul.f32 %v154, %v154
    %v157 = vsel %vm151, %v155, 0.0
    %v158 = vsel %vm152, %v156, 0.0
    %v159 = vadd.f32 %v157, %v158
    %160 = vadd.xlane.f32.xlu0 %v159
    %v161 = vpop.xlane.xlu0 %160
    %v162 = vrot.slane %v161, 4
    %v163 = vadd.f32 %v161, %v162
    %v164 = vrot.slane %v163, 2
    %v165 = vadd.f32 %v163, %v164
    %v166 = vrot.slane %v165, 1
    %v167 = vadd.f32 %v165, %v166
    %s168 = vtos %v167
    %s169 = sadd.f32 %s131, %s168
    %170 = vrot.lane.b32.xlu0 %v49, 126
    %v171 = vpop.permute.xlu0 %170
    %172 = vrot.lane.b32.xlu0 %v50, 126
    %v173 = vpop.permute.xlu0 %172
    %vm174 = vcmp.lt.s32.totalorder %v68, 126
    %v175 = vsel %vm174, %v171, %v173
    %v176 = vsel %vm174, %v173, %v171
    %177 = vrot.lane.b32.xlu0 %v53, 126
    %v178 = vpop.permute.xlu0 %177
    %179 = vrot.lane.b32.xlu0 %v54, 126
    %v180 = vpop.permute.xlu0 %179
    %v181 = vsel %vm174, %v178, %v180
    %v182 = vsel %vm174, %v180, %v178
    %vm183 = vcmp.gt.f32.partialorder %v181, 0.5
    %vm184 = vcmp.gt.f32.partialorder %v182, 0.5
    %vm185 = vmand %vm45, %vm183
    %vm186 = vmand %vm46, %vm184
    %vm187 = vcmp.lt.s32.totalorder %v92, 14
    %vm188 = vcmp.lt.s32.totalorder %v93, 14
    %vm189 = vmand %vm185, %vm187
    %vm190 = vmand %vm186, %vm188
    %v191 = vsub.f32 %v175, %v49
    %v192 = vsub.f32 %v176, %v50
    %v193 = vmul.f32 %v191, %v191
    %v194 = vmul.f32 %v192, %v192
    %v195 = vsel %vm189, %v193, 0.0
    %v196 = vsel %vm190, %v194, 0.0
    %v197 = vadd.f32 %v195, %v196
    %198 = vadd.xlane.f32.xlu0 %v197
    %v199 = vpop.xlane.xlu0 %198
    %v200 = vrot.slane %v199, 4
    %v201 = vadd.f32 %v199, %v200
    %v202 = vrot.slane %v201, 2
    %v203 = vadd.f32 %v201, %v202
    %v204 = vrot.slane %v203, 1
    %v205 = vadd.f32 %v203, %v204
    %s206 = vtos %v205
    %s207 = sadd.f32 %s169, %s206
    %208 = vrot.lane.b32.xlu0 %v49, 96
    %v209 = vpop.permute.xlu0 %208
    %210 = vrot.lane.b32.xlu0 %v50, 96
    %v211 = vpop.permute.xlu0 %210
    %vm212 = vcmp.lt.s32.totalorder %v68, 96
    %v213 = vsel %vm212, %v209, %v211
    %v214 = vsel %vm212, %v211, %v209
    %215 = vrot.lane.b32.xlu0 %v53, 96
    %v216 = vpop.permute.xlu0 %215
    %217 = vrot.lane.b32.xlu0 %v54, 96
    %v218 = vpop.permute.xlu0 %217
    %v219 = vsel %vm212, %v216, %v218
    %v220 = vsel %vm212, %v218, %v216
    %vm221 = vcmp.gt.f32.partialorder %v219, 0.5
    %vm222 = vcmp.gt.f32.partialorder %v220, 0.5
    %vm223 = vmand %vm45, %vm221
    %vm224 = vmand %vm46, %vm222
    %vm225 = vcmp.lt.s32.totalorder %v68, 224
    %vm226 = vcmp.lt.s32.totalorder %v69, 224
    %vm227 = vmand %vm223, %vm225
    %vm228 = vmand %vm224, %vm226
    %v229 = vsub.f32 %v213, %v49
    %v230 = vsub.f32 %v214, %v50
    %v231 = vmul.f32 %v229, %v229
    %v232 = vmul.f32 %v230, %v230
    %v233 = vsel %vm227, %v231, 0.0
    %v234 = vsel %vm228, %v232, 0.0
    %v235 = vadd.f32 %v233, %v234
    %236 = vadd.xlane.f32.xlu0 %v235
    %v237 = vpop.xlane.xlu0 %236
    %v238 = vrot.slane %v237, 4
    %v239 = vadd.f32 %v237, %v238
    %v240 = vrot.slane %v239, 2
    %v241 = vadd.f32 %v239, %v240
    %v242 = vrot.slane %v241, 1
    %v243 = vadd.f32 %v241, %v242
    %s244 = vtos %v243
    %s245 = sadd.f32 %s207, %s244
    %246 = vrot.lane.b32.xlu0 %v49, 124
    %v247 = vpop.permute.xlu0 %246
    %248 = vrot.lane.b32.xlu0 %v50, 124
    %v249 = vpop.permute.xlu0 %248
    %vm250 = vcmp.lt.s32.totalorder %v68, 124
    %v251 = vsel %vm250, %v247, %v249
    %v252 = vsel %vm250, %v249, %v247
    %253 = vrot.lane.b32.xlu0 %v53, 124
    %v254 = vpop.permute.xlu0 %253
    %255 = vrot.lane.b32.xlu0 %v54, 124
    %v256 = vpop.permute.xlu0 %255
    %v257 = vsel %vm250, %v254, %v256
    %v258 = vsel %vm250, %v256, %v254
    %vm259 = vcmp.gt.f32.partialorder %v257, 0.5
    %vm260 = vcmp.gt.f32.partialorder %v258, 0.5
    %vm261 = vmand %vm45, %vm259
    %vm262 = vmand %vm46, %vm260
    %vm263 = vcmp.lt.s32.totalorder %v92, 12
    %vm264 = vcmp.lt.s32.totalorder %v93, 12
    %vm265 = vmand %vm261, %vm263
    %vm266 = vmand %vm262, %vm264
    %v267 = vsub.f32 %v251, %v49
    %v268 = vsub.f32 %v252, %v50
    %v269 = vmul.f32 %v267, %v267
    %v270 = vmul.f32 %v268, %v268
    %v271 = vsel %vm265, %v269, 0.0
    %v272 = vsel %vm266, %v270, 0.0
    %v273 = vadd.f32 %v271, %v272
    %274 = vadd.xlane.f32.xlu0 %v273
    %v275 = vpop.xlane.xlu0 %274
    %v276 = vrot.slane %v275, 4
    %v277 = vadd.f32 %v275, %v276
    %v278 = vrot.slane %v277, 2
    %v279 = vadd.f32 %v277, %v278
    %v280 = vrot.slane %v279, 1
    %v281 = vadd.f32 %v279, %v280
    %s282 = vtos %v281
    %s283 = sadd.f32 %s245, %s282
    %284 = vrot.lane.b32.xlu0 %v49, 64
    %v285 = vpop.permute.xlu0 %284
    %286 = vrot.lane.b32.xlu0 %v50, 64
    %v287 = vpop.permute.xlu0 %286
    %vm288 = vcmp.lt.s32.totalorder %v68, 64
    %v289 = vsel %vm288, %v285, %v287
    %v290 = vsel %vm288, %v287, %v285
    %291 = vrot.lane.b32.xlu0 %v53, 64
    %v292 = vpop.permute.xlu0 %291
    %293 = vrot.lane.b32.xlu0 %v54, 64
    %v294 = vpop.permute.xlu0 %293
    %v295 = vsel %vm288, %v292, %v294
    %v296 = vsel %vm288, %v294, %v292
    %vm297 = vcmp.gt.f32.partialorder %v295, 0.5
    %vm298 = vcmp.gt.f32.partialorder %v296, 0.5
    %vm299 = vmand %vm45, %vm297
    %vm300 = vmand %vm46, %vm298
    %vm301 = vcmp.lt.s32.totalorder %v68, 192
    %vm302 = vcmp.lt.s32.totalorder %v69, 192
    %vm303 = vmand %vm299, %vm301
    %vm304 = vmand %vm300, %vm302
    %v305 = vsub.f32 %v289, %v49
    %v306 = vsub.f32 %v290, %v50
    %v307 = vmul.f32 %v305, %v305
    %v308 = vmul.f32 %v306, %v306
    %v309 = vsel %vm303, %v307, 0.0
    %v310 = vsel %vm304, %v308, 0.0
    %v311 = vadd.f32 %v309, %v310
    %312 = vadd.xlane.f32.xlu0 %v311
    %v313 = vpop.xlane.xlu0 %312
    %v314 = vrot.slane %v313, 4
    %v315 = vadd.f32 %v313, %v314
    %v316 = vrot.slane %v315, 2
    %v317 = vadd.f32 %v315, %v316
    %v318 = vrot.slane %v317, 1
    %v319 = vadd.f32 %v317, %v318
    %s320 = vtos %v319
    %s321 = sadd.f32 %s283, %s320
    %v322 = vstv %s66
    %323 = vst [vmem:[#allocation7] sm:$0xff] %v322
    %v324 = vstv %s321
    %325 = vst [vmem:[#allocation8] sm:$0xff] %v324
    // Predicated region
    $region18: #{tpu_custom_call.1} parent=1 // pred_check
      _
    $region19: #{tpu_custom_call.1} parent=1 // pred_check_branch
      %327 = sbr.rel (0) target = $region21
    $region20: #{tpu_custom_call.1} parent=1 // pred_region
      %s329 = ssub.s32 128, 128
      %330 = vsyncadd [#allocation4], %s329
      %s332 = sshll.u32 [#allocation7], 4
      %s333 = int_to_ptr.vmem [resolvable:$true] %s332
      %335 = dma.vmem_to_hbm [thread:$0]  %s333, 128, %s2, [#allocation4]
    $region21: #{tpu_custom_call.1} parent=1 // pred_fallthru
      _
    // Predicated region
    $region22: #{tpu_custom_call.1} parent=1 // pred_check
      _
    $region23: #{tpu_custom_call.1} parent=1 // pred_check_branch
      %337 = sbr.rel (0) target = $region25
    $region24: #{tpu_custom_call.1} parent=1 // pred_region
      %s339 = ssub.s32 128, 128
      %340 = vsyncadd [#allocation9], %s339
      %s342 = sshll.u32 [#allocation8], 4
      %s343 = int_to_ptr.vmem [resolvable:$true] %s342
      %345 = dma.vmem_to_hbm [thread:$0]  %s343, 128, %s3, [#allocation9]
    $region25: #{tpu_custom_call.1} parent=1 // pred_fallthru
      _
    // Predicated region
    $region26: #{tpu_custom_call.1} parent=1 // pred_check
      _
    $region27: #{tpu_custom_call.1} parent=1 // pred_check_branch
      %347 = sbr.rel (0) target = $region29
    $region28: #{tpu_custom_call.1} parent=1 // pred_region
      %348 = dma.done [#allocation4], 128
    $region29: #{tpu_custom_call.1} parent=1 // pred_fallthru
      _
    // Predicated region
    $region30: #{tpu_custom_call.1} parent=1 // pred_check
      _
    $region31: #{tpu_custom_call.1} parent=1 // pred_check_branch
      %350 = sbr.rel (0) target = $region33
    $region32: #{tpu_custom_call.1} parent=1 // pred_region
      %351 = dma.done [#allocation9], 128
    $region33: #{tpu_custom_call.1} parent=1 // pred_fallthru
      _
    %352 = vsyncpa [#allocation3], 1
    %353 = vsyncpa [#allocation6], 1
    %354 = vsyncpa [#allocation4], 1
    %355 = vsyncpa [#allocation9], 1

</llo_original>
